<compile_context>
chip_gen: v7x
topology: tpu7x:2x2x1
jax: 0.10.0
libtpu: 0.0.40
codegen_flags: <defaults>
</compile_context>

<pallas_src>
import jax
import jax.numpy as jnp
from jax.experimental import pallas as pl
from jax.experimental.pallas import tpu as pltpu


def _round_up(x, m):
    return ((x + m - 1) // m) * m


# ----------------------------------------------------------------------------
# Kernels
# ----------------------------------------------------------------------------
def _hourglass_mlp_kernel(x_ref, w1_ref, b1_ref, w2_ref, b2_ref, o_ref):
    """Single-shot path: whole hidden dim resident (grid over rows only)."""
    # x_ref : (tm, D)   w1_ref : (D, H)   b1_ref : (1, H)
    # w2_ref: (H, D)    b2_ref : (1, D)   o_ref  : (tm, D)
    h = jnp.dot(x_ref[...], w1_ref[...], preferred_element_type=jnp.float32)
    h = h + b1_ref[...].astype(jnp.float32)
    h = h * jax.nn.sigmoid(h)            # SiLU on the f32 accumulator
    h = h.astype(w2_ref.dtype)           # back to stored dtype -> MXU fast path
    y = jnp.dot(h, w2_ref[...], preferred_element_type=jnp.float32)
    y = y + b2_ref[...].astype(jnp.float32)
    o_ref[...] = y.astype(o_ref.dtype)


def _hourglass_mlp_tiled_kernel(x_ref, w1_ref, b1_ref, w2_ref, b2_ref, o_ref,
                                acc_ref):
    """Hidden-dim streamed path: grid=(rows, hidden tiles), f32 accumulator."""
    # x_ref : (tm, D)   w1_ref : (D, th)  b1_ref : (1, th)
    # w2_ref: (th, D)   b2_ref : (1, D)   o_ref  : (tm, D)  acc_ref: (tm, D) f32
    h_idx = pl.program_id(1)

    h = jnp.dot(x_ref[...], w1_ref[...], preferred_element_type=jnp.float32)
    h = h + b1_ref[...].astype(jnp.float32)
    h = h * jax.nn.sigmoid(h)
    h = h.astype(w2_ref.dtype)
    part = jnp.dot(h, w2_ref[...], preferred_element_type=jnp.float32)

    @pl.when(h_idx == 0)
    def _():
        acc_ref[...] = jnp.zeros_like(acc_ref)

    acc_ref[...] += part

    @pl.when(h_idx == pl.num_programs(1) - 1)
    def _():
        o_ref[...] = (acc_ref[...] + b2_ref[...].astype(jnp.float32)
                      ).astype(o_ref.dtype)


# ----------------------------------------------------------------------------
# Wrapper
# ----------------------------------------------------------------------------
def hourglass_dense_layer(x, w1, b1, w2, b2, *, tm=512, th=None):
    """y = silu(x @ w1 + b1) @ w2 + b2.  x: (..., D); weights stored (in, out)."""
    orig_shape = x.shape
    D = orig_shape[-1]
    H = w1.shape[1]
    assert w1.shape == (D, H) and w2.shape == (H, D)
    x2d = x.reshape(-1, D)
    M = x2d.shape[0]

    x_is = jnp.dtype(x.dtype).itemsize
    w_is = jnp.dtype(w1.dtype).itemsize
    sub = 16 if x_is == 2 else 8          # sublane quantum for the row tile

    # ---- hidden-dim tile (stream W1 cols / W2 rows when weights are big) ----
    if th is not None:
        th_eff = th
    else:
        weight_budget = 24 * 1024 * 1024          # double-buffered weight tiles
        per_col = 2 * (2 * D * w_is)              # W1 col + W2 row, x2 buffers
        th_eff = H if H * per_col <= weight_budget else max(
            128, (weight_budget // per_col) // 128 * 128)
    if th_eff < H:
        th_eff = max(128, (th_eff // 128) * 128)  # lane-aligned when split
    if th_eff >= H:
        th_eff, h_pad = H, H                      # fully resident hidden dim
    else:
        h_pad = _round_up(H, th_eff)
    grid_h = h_pad // th_eff

    # ---- row tile (x / out double-buffered + f32 accumulator) --------------
    row_budget = 20 * 1024 * 1024
    per_row = 4 * D * x_is + 4 * D                # 2x2 x/out buffers + acc
    tm_cap = max(sub, (row_budget // per_row) // sub * sub)
    tm_eff = min(tm, tm_cap, _round_up(M, sub))
    tm_eff = _round_up(tm_eff, sub)
    m_pad = _round_up(M, tm_eff)
    grid_m = m_pad // tm_eff

    if m_pad != M:
        x2d = jnp.pad(x2d, ((0, m_pad - M), (0, 0)))

    b1_2d = b1.reshape(1, H)
    b2_2d = b2.reshape(1, D)
    w1_p, b1_p, w2_p = w1, b1_2d, w2
    if h_pad != H:
        # Zero-padded hidden columns: silu(0) = 0 and the matching W2 rows are
        # zero, so padded slabs contribute exactly nothing.
        w1_p = jnp.pad(w1, ((0, 0), (0, h_pad - H)))
        b1_p = jnp.pad(b1_2d, ((0, 0), (0, h_pad - H)))
        w2_p = jnp.pad(w2, ((0, h_pad - H), (0, 0)))

    cost = pl.CostEstimate(
        flops=4 * M * D * H,                       # two matmuls: 2*M*D*H each
        transcendentals=M * H,                     # sigmoid inside SiLU
        bytes_accessed=(2 * M * D * x_is                          # x in + y out
                        + 2 * D * H * w_is                        # W1 + W2
                        + (H + D) * jnp.dtype(b1.dtype).itemsize),
    )

    if grid_h == 1:
        grid_spec = pltpu.PrefetchScalarGridSpec(
            num_scalar_prefetch=0,
            grid=(grid_m,),
            in_specs=[
                pl.BlockSpec((tm_eff, D), lambda i: (i, 0)),   # x (streamed)
                pl.BlockSpec((D, h_pad), lambda i: (0, 0)),    # W1 (resident)
                pl.BlockSpec((1, h_pad), lambda i: (0, 0)),    # b1 (resident)
                pl.BlockSpec((h_pad, D), lambda i: (0, 0)),    # W2 (resident)
                pl.BlockSpec((1, D), lambda i: (0, 0)),        # b2 (resident)
            ],
            out_specs=pl.BlockSpec((tm_eff, D), lambda i: (i, 0)),
        )
        kernel = _hourglass_mlp_kernel
        dim_sem = ("parallel",)
    else:
        grid_spec = pltpu.PrefetchScalarGridSpec(
            num_scalar_prefetch=0,
            grid=(grid_m, grid_h),
            in_specs=[
                pl.BlockSpec((tm_eff, D), lambda i, h: (i, 0)),   # x (reused over h)
                pl.BlockSpec((D, th_eff), lambda i, h: (0, h)),   # W1 col slab
                pl.BlockSpec((1, th_eff), lambda i, h: (0, h)),   # b1 slab
                pl.BlockSpec((th_eff, D), lambda i, h: (h, 0)),   # W2 row slab
                pl.BlockSpec((1, D), lambda i, h: (0, 0)),        # b2
            ],
            out_specs=pl.BlockSpec((tm_eff, D), lambda i, h: (i, 0)),
            scratch_shapes=[pltpu.VMEM((tm_eff, D), jnp.float32)],
        )
        kernel = _hourglass_mlp_tiled_kernel
        dim_sem = ("parallel", "arbitrary")        # reduction axis last

    out = pl.pallas_call(
        kernel,
        out_shape=jax.ShapeDtypeStruct((m_pad, D), x.dtype),
        grid_spec=grid_spec,
        compiler_params=pltpu.CompilerParams(
            dimension_semantics=dim_sem,
            vmem_limit_bytes=64 * 1024 * 1024,
        ),
        cost_estimate=cost,
    )(x2d, w1_p, b1_p, w2_p, b2_2d)

    if m_pad != M:
        out = out[:M]
    return out.reshape(orig_shape)


# ----------------------------------------------------------------------------
# Init / reference / smoke test
# ----------------------------------------------------------------------------
def init_params(key, input_dim, downscale_ratio, dtype=jnp.float32):
    """Deterministic init matching nn.Linear shapes (uniform +-1/sqrt(fan_in))."""
    hidden = input_dim // downscale_ratio
    k1, k2, k3, k4 = jax.random.split(key, 4)
    bound1 = 1.0 / jnp.sqrt(input_dim)
    bound2 = 1.0 / jnp.sqrt(hidden)
    # stored as (in, out): transpose of PyTorch's (out, in)
    w1 = jax.random.uniform(k1, (input_dim, hidden), dtype, -bound1, bound1)
    b1 = jax.random.uniform(k2, (hidden,), dtype, -bound1, bound1)
    w2 = jax.random.uniform(k3, (hidden, input_dim), dtype, -bound2, bound2)
    b2 = jax.random.uniform(k4, (input_dim,), dtype, -bound2, bound2)
    return w1, b1, w2, b2


def reference(x, w1, b1, w2, b2):
    h = x @ w1 + b1
    h = h * jax.nn.sigmoid(h)
    return h @ w2 + b2


if __name__ == "__main__":
    key = jax.random.PRNGKey(0)

    # --- test 1: small shapes, resident-weights fast path --------------------
    B, L, D = 2, 8, 32
    downscale_ratio = 4
    kx, kp, kx2, kp2 = jax.random.split(key, 4)
    x = jax.random.normal(kx, (B, L, D), jnp.float32)
    w1, b1, w2, b2 = init_params(kp, D, downscale_ratio)

    y = hourglass_dense_layer(x, w1, b1, w2, b2)
    y = jax.block_until_ready(y)
    y_ref = reference(x, w1, b1, w2, b2)
    assert y.shape == x.shape
    assert jnp.allclose(y, y_ref, atol=1e-4, rtol=1e-4), "mismatch (resident path)"

    # --- test 2: hidden-dim streamed path (forced small hidden tile) ---------
    D2, ratio2 = 384, 2                       # H = 192 -> padded to 256, grid_h = 2
    x2 = jax.random.normal(kx2, (B, L, D2), jnp.float32)
    w1b, b1b, w2b, b2b = init_params(kp2, D2, ratio2)

    y2 = hourglass_dense_layer(x2, w1b, b1b, w2b, b2b, th=128)
    y2 = jax.block_until_ready(y2)
    y2_ref = reference(x2, w1b, b1b, w2b, b2b)
    assert y2.shape == x2.shape
    assert jnp.allclose(y2, y2_ref, atol=1e-4, rtol=1e-4), "mismatch (tiled path)"

    print("KERNEL_OK")
</pallas_src>

<mosaic_0001>
module attributes {stable_mosaic.version = 11 : i64} {
  func.func @_hourglass_mlp_kernel(%arg0: i32, %arg1: memref<16x32xf32, #tpu.memory_space<vmem>>, %arg2: memref<32x8xf32, #tpu.memory_space<vmem>>, %arg3: memref<1x8xf32, #tpu.memory_space<vmem>>, %arg4: memref<8x32xf32, #tpu.memory_space<vmem>>, %arg5: memref<1x32xf32, #tpu.memory_space<vmem>>, %arg6: memref<16x32xf32, #tpu.memory_space<vmem>>) attributes {dimension_semantics = [#tpu.dimension_semantics<parallel>], iteration_bounds = array<i64: 1>, scalar_prefetch = 0 : i64, scratch_operands = 0 : i64, tpu.core_type = #tpu.core_type<tc>, window_params = [{transform_indices = @transform_0, window_bounds = array<i64: 16, 32>}, {pipeline_mode = #tpu.pipeline_mode<synchronous>, transform_indices = @transform_1, window_bounds = array<i64: 32, 8>}, {pipeline_mode = #tpu.pipeline_mode<synchronous>, transform_indices = @transform_2, window_bounds = array<i64: 1, 8>}, {pipeline_mode = #tpu.pipeline_mode<synchronous>, transform_indices = @transform_3, window_bounds = array<i64: 8, 32>}, {pipeline_mode = #tpu.pipeline_mode<synchronous>, transform_indices = @transform_4, window_bounds = array<i64: 1, 32>}, {transform_indices = @transform_5, window_bounds = array<i64: 16, 32>}]} {
    %c0 = arith.constant 0 : index
    %c0_0 = arith.constant 0 : index
    %0 = vector.load %arg1[%c0, %c0_0] : memref<16x32xf32, #tpu.memory_space<vmem>>, vector<16x32xf32>
    %c0_1 = arith.constant 0 : index
    %c0_2 = arith.constant 0 : index
    %1 = vector.load %arg2[%c0_1, %c0_2] : memref<32x8xf32, #tpu.memory_space<vmem>>, vector<32x8xf32>
    %cst = arith.constant dense<0.000000e+00> : vector<16x8xf32>
    %2 = tpu.matmul %0, %1, %cst {dimension_numbers = #tpu.dot_dimension_numbers<[1], [0], [0], [1], [0, 0, 1, 1], [], []>} : vector<16x32xf32>, vector<32x8xf32>, vector<16x8xf32> -> vector<16x8xf32>
    %c0_3 = arith.constant 0 : index
    %c0_4 = arith.constant 0 : index
    %3 = vector.load %arg3[%c0_3, %c0_4] : memref<1x8xf32, #tpu.memory_space<vmem>>, vector<1x8xf32>
    %4 = vector.broadcast %3 : vector<1x8xf32> to vector<16x8xf32>
    %5 = arith.addf %2, %4 : vector<16x8xf32>
    %6 = arith.negf %5 : vector<16x8xf32>
    %7 = math.exp %6 : vector<16x8xf32>
    %cst_5 = arith.constant 1.000000e+00 : f32
    %8 = vector.broadcast %cst_5 : f32 to vector<16x8xf32>
    %9 = arith.addf %8, %7 : vector<16x8xf32>
    %10 = arith.divf %8, %9 : vector<16x8xf32>
    %11 = arith.mulf %5, %10 : vector<16x8xf32>
    %c0_6 = arith.constant 0 : index
    %c0_7 = arith.constant 0 : index
    %12 = vector.load %arg4[%c0_6, %c0_7] : memref<8x32xf32, #tpu.memory_space<vmem>>, vector<8x32xf32>
    %cst_8 = arith.constant dense<0.000000e+00> : vector<16x32xf32>
    %13 = tpu.matmul %11, %12, %cst_8 {dimension_numbers = #tpu.dot_dimension_numbers<[1], [0], [0], [1], [0, 0, 1, 1], [], []>} : vector<16x8xf32>, vector<8x32xf32>, vector<16x32xf32> -> vector<16x32xf32>
    %c0_9 = arith.constant 0 : index
    %c0_10 = arith.constant 0 : index
    %14 = vector.load %arg5[%c0_9, %c0_10] : memref<1x32xf32, #tpu.memory_space<vmem>>, vector<1x32xf32>
    %15 = vector.broadcast %14 : vector<1x32xf32> to vector<16x32xf32>
    %16 = arith.addf %13, %15 : vector<16x32xf32>
    %c0_11 = arith.constant 0 : index
    %c0_12 = arith.constant 0 : index
    %17 = vector.load %arg6[%c0_11, %c0_12] : memref<16x32xf32, #tpu.memory_space<vmem>>, vector<16x32xf32>
    tpu.vector_store %arg6[%c0_11, %c0_12], %16 {strides = array<i32>} : memref<16x32xf32, #tpu.memory_space<vmem>>, vector<16x32xf32>,
    return
  }
  func.func @transform_0(%arg0: i32) -> (i32, i32) {
    %c0_i32 = arith.constant 0 : i32
    %c0_i32_0 = arith.constant 0 : i32
    return %arg0, %c0_i32 : i32, i32
  }
  func.func @transform_1(%arg0: i32) -> (i32, i32) {
    %c0_i32 = arith.constant 0 : i32
    %c0_i32_0 = arith.constant 0 : i32
    %c0_i32_1 = arith.constant 0 : i32
    return %c0_i32, %c0_i32_0 : i32, i32
  }
  func.func @transform_2(%arg0: i32) -> (i32, i32) {
    %c0_i32 = arith.constant 0 : i32
    %c0_i32_0 = arith.constant 0 : i32
    %c0_i32_1 = arith.constant 0 : i32
    return %c0_i32, %c0_i32_0 : i32, i32
  }
  func.func @transform_3(%arg0: i32) -> (i32, i32) {
    %c0_i32 = arith.constant 0 : i32
    %c0_i32_0 = arith.constant 0 : i32
    %c0_i32_1 = arith.constant 0 : i32
    return %c0_i32, %c0_i32_0 : i32, i32
  }
  func.func @transform_4(%arg0: i32) -> (i32, i32) {
    %c0_i32 = arith.constant 0 : i32
    %c0_i32_0 = arith.constant 0 : i32
    %c0_i32_1 = arith.constant 0 : i32
    return %c0_i32, %c0_i32_0 : i32, i32
  }
  func.func @transform_5(%arg0: i32) -> (i32, i32) {
    %c0_i32 = arith.constant 0 : i32
    %c0_i32_0 = arith.constant 0 : i32
    return %arg0, %c0_i32 : i32, i32
  }
}

</mosaic_0001>

<llo_original>
// kernel: tpu_custom_call.1
$region0: #{tpu_custom_call.1}
  #allocation0 [shape = 'u32[]', space=smem, size = 0x4, offset = 0x4, fixed_abs, tag = 'smem constant byte address 0x4 - core index']
  #allocation1 [shape = 'u32[144,128]{1,0:T(1,128)}', space=vmem, size = 0x12000, scoped, tag = 'internal scratch']
  %s0 = inlined_call_operand.hbm [shape: f32[16,32], index: 0, kind: input, shape index: {}]
  %s1 = inlined_call_operand.hbm [shape: f32[32,8], index: 1, kind: input, shape index: {}]
  %s2 = inlined_call_operand.hbm [shape: f32[1,8], index: 2, kind: input, shape index: {}]
  %s3 = inlined_call_operand.hbm [shape: f32[8,32], index: 3, kind: input, shape index: {}]
  %s4 = inlined_call_operand.hbm [shape: f32[1,32], index: 4, kind: input, shape index: {}]
  %s5 = inlined_call_operand.hbm [shape: f32[16,32], index: 5, kind: output, shape index: {}]
  %s6 = sld [smem:[#allocation0]]
  $region50: #{tpu_custom_call.1} parent=0
    _
  %s8 = ssub.s32 1, %s6
  %s9 = scalar_select 0, %s8, %s6
  $region1: #{tpu_custom_call.1} parent=0
    #allocation2 [shape = 'u8[8192]{0}', space=vmem, size = 0x2000, scoped, tag = 'input window, operand 0, single buffered']
    #allocation3 [shape = 's32[1]{0}', space=sflag, size = 0x4, scoped, tag = 'scoped memory for tpu_custom_call.1']
    #allocation4 [shape = 's32[1]{0}', space=sflag, size = 0x4, scoped, tag = 'scoped memory for tpu_custom_call.1']
    #allocation5 [shape = 'u8[16384]{0}', space=vmem, size = 0x4000, scoped, tag = 'input window, operand 1, single buffered']
    #allocation6 [shape = 's32[1]{0}', space=sflag, size = 0x4, scoped, tag = 'scoped memory for tpu_custom_call.1']
    #allocation7 [shape = 'u8[512]{0}', space=vmem, size = 0x400, scoped, tag = 'input window, operand 2, single buffered']
    #allocation8 [shape = 'u8[4096]{0}', space=vmem, size = 0x1000, scoped, tag = 'input window, operand 3, single buffered']
    #allocation9 [shape = 's32[1]{0}', space=sflag, size = 0x4, scoped, tag = 'scoped memory for tpu_custom_call.1']
    #allocation10 [shape = 'u8[512]{0}', space=vmem, size = 0x400, scoped, tag = 'input window, operand 4, single buffered']
    #allocation11 [shape = 'u8[8192]{0}', space=vmem, size = 0x2000, scoped, tag = 'output window, operand 0, single buffered']
    %10 = vsyncpa [#allocation3], 0
    %11 = vsyncpa [#allocation6], 0
    %12 = vsyncpa [#allocation9], 0
    %13 = vsyncpa [#allocation4], 0
    // Predicated region
    $region2: #{tpu_custom_call.1} parent=1 // pred_check
      _
    $region3: #{tpu_custom_call.1} parent=1 // pred_check_branch
      %15 = sbr.rel (0) target = $region5
    $region4: #{tpu_custom_call.1} parent=1 // pred_region
      %s17 = ssub.s32 256, 256
      %18 = vsyncadd [#allocation3], %s17
      %s19 = sshll.u32 [#allocation2], 4
      %s20 = int_to_ptr.vmem [resolvable:$true] %s19
      %25 = dma.hbm_to_vmem [thread:$0]  %s0, 256, %s20, [#allocation3], 128, 128, 8
    $region5: #{tpu_custom_call.1} parent=1 // pred_fallthru
      _
    // Predicated region
    $region6: #{tpu_custom_call.1} parent=1 // pred_check
      _
    $region7: #{tpu_custom_call.1} parent=1 // pred_check_branch
      %27 = sbr.rel (0) target = $region9
    $region8: #{tpu_custom_call.1} parent=1 // pred_region
      %s29 = ssub.s32 512, 512
      %30 = vsyncadd [#allocation6], %s29
      %s31 = sshll.u32 [#allocation5], 4
      %s32 = int_to_ptr.vmem [resolvable:$true] %s31
      %37 = dma.hbm_to_vmem [thread:$0]  %s1, 512, %s32, [#allocation6], 128, 128, 8
    $region9: #{tpu_custom_call.1} parent=1 // pred_fallthru
      _
    // Predicated region
    $region10: #{tpu_custom_call.1} parent=1 // pred_check
      _
    $region11: #{tpu_custom_call.1} parent=1 // pred_check_branch
      %39 = sbr.rel (0) target = $region13
    $region12: #{tpu_custom_call.1} parent=1 // pred_region
      %s41 = ssub.s32 16, 16
      %42 = vsyncadd [#allocation6], %s41
      %s44 = sshll.u32 [#allocation7], 4
      %s45 = int_to_ptr.vmem [resolvable:$true] %s44
      %47 = dma.hbm_to_vmem [thread:$0]  %s2, 16, %s45, [#allocation6]
    $region13: #{tpu_custom_call.1} parent=1 // pred_fallthru
      _
    // Predicated region
    $region14: #{tpu_custom_call.1} parent=1 // pred_check
      _
    $region15: #{tpu_custom_call.1} parent=1 // pred_check_branch
      %49 = sbr.rel (0) target = $region17
    $region16: #{tpu_custom_call.1} parent=1 // pred_region
      %s51 = ssub.s32 128, 128
      %52 = vsyncadd [#allocation9], %s51
      %s54 = sshll.u32 [#allocation8], 4
      %s55 = int_to_ptr.vmem [resolvable:$true] %s54
      %57 = dma.hbm_to_vmem [thread:$0]  %s3, 128, %s55, [#allocation9]
    $region17: #{tpu_custom_call.1} parent=1 // pred_fallthru
      _
    // Predicated region
    $region18: #{tpu_custom_call.1} parent=1 // pred_check
      _
    $region19: #{tpu_custom_call.1} parent=1 // pred_check_branch
      %59 = sbr.rel (0) target = $region21
    $region20: #{tpu_custom_call.1} parent=1 // pred_region
      %s61 = ssub.s32 16, 16
      %62 = vsyncadd [#allocation9], %s61
      %s64 = sshll.u32 [#allocation10], 4
      %s65 = int_to_ptr.vmem [resolvable:$true] %s64
      %67 = dma.hbm_to_vmem [thread:$0]  %s4, 16, %s65, [#allocation9]
    $region21: #{tpu_custom_call.1} parent=1 // pred_fallthru
      _
    // Predicated region
    $region22: #{tpu_custom_call.1} parent=1 // pred_check
      _
    $region23: #{tpu_custom_call.1} parent=1 // pred_check_branch
      %69 = sbr.rel (0) target = $region25
    $region24: #{tpu_custom_call.1} parent=1 // pred_region
      %70 = dma.done [#allocation3], 256
    $region25: #{tpu_custom_call.1} parent=1 // pred_fallthru
      _
    // Predicated region
    $region26: #{tpu_custom_call.1} parent=1 // pred_check
      _
    $region27: #{tpu_custom_call.1} parent=1 // pred_check_branch
      %72 = sbr.rel (0) target = $region29
    $region28: #{tpu_custom_call.1} parent=1 // pred_region
      %73 = dma.done [#allocation6], 512
    $region29: #{tpu_custom_call.1} parent=1 // pred_fallthru
      _
    // Predicated region
    $region30: #{tpu_custom_call.1} parent=1 // pred_check
      _
    $region31: #{tpu_custom_call.1} parent=1 // pred_check_branch
      %75 = sbr.rel (0) target = $region33
    $region32: #{tpu_custom_call.1} parent=1 // pred_region
      %76 = dma.done [#allocation6], 16
    $region33: #{tpu_custom_call.1} parent=1 // pred_fallthru
      _
    // Predicated region
    $region34: #{tpu_custom_call.1} parent=1 // pred_check
      _
    $region35: #{tpu_custom_call.1} parent=1 // pred_check_branch
      %78 = sbr.rel (0) target = $region37
    $region36: #{tpu_custom_call.1} parent=1 // pred_region
      %79 = dma.done [#allocation9], 128
    $region37: #{tpu_custom_call.1} parent=1 // pred_fallthru
      _
    // Predicated region
    $region38: #{tpu_custom_call.1} parent=1 // pred_check
      _
    $region39: #{tpu_custom_call.1} parent=1 // pred_check_branch
      %81 = sbr.rel (0) target = $region41
    $region40: #{tpu_custom_call.1} parent=1 // pred_region
      %82 = dma.done [#allocation9], 16
    $region41: #{tpu_custom_call.1} parent=1 // pred_fallthru
      _
    %v83 = vld [vmem:[#allocation2] sm:$0xff]
    %v84 = vld [vmem:[#allocation2 + $0x8] sm:$0xff]
    %v85 = vld [vmem:[#allocation5] sm:$0xff]
    %v86 = vld [vmem:[#allocation5 + $0x8] sm:$0xff]
    %v87 = vld [vmem:[#allocation5 + $0x10] sm:$0xff]
    %v88 = vld [vmem:[#allocation5 + $0x18] sm:$0xff]
    %v89 = vld [vmem:[#allocation7] sm:$0x1]
    %v91 = vlaneseq
    %v92 = vshrl.u32 %v91, 7
    %v93 = vsub.s32 0, %v92
    %v94 = vrot.slane %v89, %v93
    %vm96 = vcmask 261120
    %v98 = vsel %vm96, %v83, 0
    %v101 = vsel %vm96, %v84, 0
    %103 = vmatprep.subr.mxu0 0.0
    %104 = vmatpush1.msra.mxu0 %v85
    %105 = vmatprep.subr.mxu0 0.0
    %106 = vmatpush1.msra.mxu0 %v86
    %107 = vmatprep.subr.mxu0 0.0
    %108 = vmatpush1.msra.mxu0 %v87
    %109 = vmatprep.subr.mxu0 0.0
    %110 = vmatpush1.msra.mxu0 %v88
    %111 = vmatprep.subr.mxu0 0.0
    %112 = vmatpush1.msra.mxu0 0.0
    %113 = vmatprep.subr.mxu0 0.0
    %114 = vmatpush1.msra.mxu0 0.0
    %115 = vmatprep.subr.mxu0 0.0
    %116 = vmatpush1.msra.mxu0 0.0
    %117 = vmatprep.subr.mxu0 0.0
    %118 = vmatpush1.msra.mxu0 0.0
    %119 = vmatprep.subr.mxu0 0.0
    %120 = vmatpush1.msra.mxu0 0.0
    %121 = vmatprep.subr.mxu0 0.0
    %122 = vmatpush1.msra.mxu0 0.0
    %123 = vmatprep.subr.mxu0 0.0
    %124 = vmatpush1.msra.mxu0 0.0
    %125 = vmatprep.subr.mxu0 0.0
    %126 = vmatpush1.msra.mxu0 0.0
    %127 = vmatprep.subr.mxu0 0.0
    %128 = vmatpush1.msra.mxu0 0.0
    %129 = vmatprep.subr.mxu0 0.0
    %130 = vmatpush1.msra.mxu0 0.0
    %131 = vmatprep.subr.mxu0 0.0
    %132 = vmatpush1.msra.mxu0 0.0
    %133 = vmatprep.subr.mxu0 0.0
    %134 = vmatpush1.msra.mxu0 0.0
    %135 = vmatprep.subr.mxu0 0.0
    %136 = vmatpush1.msra.mxu0 0.0
    %137 = vmatprep.subr.mxu0 0.0
    %138 = vmatpush1.msra.mxu0 0.0
    %139 = vmatprep.subr.mxu0 0.0
    %140 = vmatpush1.msra.mxu0 0.0
    %141 = vmatprep.subr.mxu0 0.0
    %142 = vmatpush1.msra.mxu0 0.0
    %143 = vmatprep.subr.mxu0 0.0
    %144 = vmatpush1.msra.mxu0 0.0
    %145 = vmatprep.subr.mxu0 0.0
    %146 = vmatpush1.msra.mxu0 0.0
    %147 = vmatprep.subr.mxu0 0.0
    %148 = vmatpush1.msra.mxu0 0.0
    %149 = vmatprep.subr.mxu0 0.0
    %150 = vmatpush1.msra.mxu0 0.0
    %151 = vmatprep.subr.mxu0 0.0
    %152 = vmatpush1.msra.mxu0 0.0
    %153 = vmatprep.subr.mxu0 0.0
    %154 = vmatpush1.msra.mxu0 0.0
    %155 = vmatprep.subr.mxu0 0.0
    %156 = vmatpush1.msra.mxu0 0.0
    %157 = vmatprep.subr.mxu0 0.0
    %158 = vmatpush1.msra.mxu0 0.0
    %159 = vmatprep.subr.mxu0 0.0
    %160 = vmatpush1.msra.mxu0 0.0
    %161 = vmatprep.subr.mxu0 0.0
    %162 = vmatpush1.msra.mxu0 0.0
    %163 = vmatprep.subr.mxu0 0.0
    %164 = vmatpush1.msra.mxu0 0.0
    %165 = vmatprep.subr.mxu0 0.0
    %166 = vmatpush1.msra.mxu0 0.0
    %167 = vmatprep.mubr.f32.mxu0 0.0
    %168 = vmatmul.mubr.f32.gmra.mrb[0].mxu0 %v98
    %v169 = vpop.f32.mrb[0].mxu0
    %v170 = vadd.f32 %v94, %v169
    %v171 = vpop.f32.mrb[0].mxu0
    %172 = vmatprep.mubr.f32.mxu0 0.0
    %173 = vmatmul.mubr.f32.gmra.mrb[0].mxu0 %v101
    %v174 = vpop.f32.mrb[0].mxu0
    %v175 = vadd.f32 %v94, %v174
    %v176 = vpop.f32.mrb[0].mxu0
    %177 = vdwg.mxu0
    %v178 = vxor.u32 %v170, 2147483648
    %v179 = vxor.u32 %v175, 2147483648
    %v180 = vmul.f32 %v178, 1.442695
    %v181 = vpow.pop %v180
    %v182 = vmul.f32 %v179, 1.442695
    %v183 = vpow.pop %v182
    %v184 = vadd.f32 %v181, 1.0
    %v185 = vadd.f32 %v183, 1.0
    %v186 = vrcp.pop %v184
    %v187 = vmul.f32 1.0, %v186
    %v188 = vrcp.pop %v185
    %v189 = vmul.f32 1.0, %v188
    %v190 = vmul.f32 %v170, %v187
    %v191 = vmul.f32 %v175, %v189
    %v192 = vld [vmem:[#allocation8] sm:$0xff]
    %v193 = vld [vmem:[#allocation10] sm:$0x1]
    %v195 = vlaneseq
    %v196 = vshrl.u32 %v195, 7
    %v197 = vsub.s32 0, %v196
    %v198 = vrot.slane %v193, %v197
    %vm200 = vcmask 64512
    %v202 = vsel %vm200, %v190, 0
    %v205 = vsel %vm200, %v191, 0
    %207 = vmatprep.subr.mxu0 0.0
    %208 = vmatpush1.msra.mxu0 %v192
    %209 = vmatprep.subr.mxu0 0.0
    %210 = vmatpush1.msra.mxu0 0.0
    %211 = vmatprep.subr.mxu0 0.0
    %212 = vmatpush1.msra.mxu0 0.0
    %213 = vmatprep.subr.mxu0 0.0
    %214 = vmatpush1.msra.mxu0 0.0
    %215 = vmatprep.subr.mxu0 0.0
    %216 = vmatpush1.msra.mxu0 0.0
    %217 = vmatprep.subr.mxu0 0.0
    %218 = vmatpush1.msra.mxu0 0.0
    %219 = vmatprep.subr.mxu0 0.0
    %220 = vmatpush1.msra.mxu0 0.0
    %221 = vmatprep.subr.mxu0 0.0
    %222 = vmatpush1.msra.mxu0 0.0
    %223 = vmatprep.subr.mxu0 0.0
    %224 = vmatpush1.msra.mxu0 0.0
    %225 = vmatprep.subr.mxu0 0.0
    %226 = vmatpush1.msra.mxu0 0.0
    %227 = vmatprep.subr.mxu0 0.0
    %228 = vmatpush1.msra.mxu0 0.0
    %229 = vmatprep.subr.mxu0 0.0
    %230 = vmatpush1.msra.mxu0 0.0
    %231 = vmatprep.subr.mxu0 0.0
    %232 = vmatpush1.msra.mxu0 0.0
    %233 = vmatprep.subr.mxu0 0.0
    %234 = vmatpush1.msra.mxu0 0.0
    %235 = vmatprep.subr.mxu0 0.0
    %236 = vmatpush1.msra.mxu0 0.0
    %237 = vmatprep.subr.mxu0 0.0
    %238 = vmatpush1.msra.mxu0 0.0
    %239 = vmatprep.subr.mxu0 0.0
    %240 = vmatpush1.msra.mxu0 0.0
    %241 = vmatprep.subr.mxu0 0.0
    %242 = vmatpush1.msra.mxu0 0.0
    %243 = vmatprep.subr.mxu0 0.0
    %244 = vmatpush1.msra.mxu0 0.0
    %245 = vmatprep.subr.mxu0 0.0
    %246 = vmatpush1.msra.mxu0 0.0
    %247 = vmatprep.subr.mxu0 0.0
    %248 = vmatpush1.msra.mxu0 0.0
    %249 = vmatprep.subr.mxu0 0.0
    %250 = vmatpush1.msra.mxu0 0.0
    %251 = vmatprep.subr.mxu0 0.0
    %252 = vmatpush1.msra.mxu0 0.0
    %253 = vmatprep.subr.mxu0 0.0
    %254 = vmatpush1.msra.mxu0 0.0
    %255 = vmatprep.subr.mxu0 0.0
    %256 = vmatpush1.msra.mxu0 0.0
    %257 = vmatprep.subr.mxu0 0.0
    %258 = vmatpush1.msra.mxu0 0.0
    %259 = vmatprep.subr.mxu0 0.0
    %260 = vmatpush1.msra.mxu0 0.0
    %261 = vmatprep.subr.mxu0 0.0
    %262 = vmatpush1.msra.mxu0 0.0
    %263 = vmatprep.subr.mxu0 0.0
    %264 = vmatpush1.msra.mxu0 0.0
    %265 = vmatprep.subr.mxu0 0.0
    %266 = vmatpush1.msra.mxu0 0.0
    %267 = vmatprep.subr.mxu0 0.0
    %268 = vmatpush1.msra.mxu0 0.0
    %269 = vmatprep.subr.mxu0 0.0
    %270 = vmatpush1.msra.mxu0 0.0
    %271 = vmatprep.mubr.f32.mxu0 0.0
    %272 = vmatmul.mubr.f32.gmra.mrb[0].mxu0 %v202
    %v273 = vpop.f32.mrb[0].mxu0
    %v274 = vadd.f32 %v198, %v273
    %v275 = vpop.f32.mrb[0].mxu0
    %276 = vmatprep.mubr.f32.mxu0 0.0
    %277 = vmatmul.mubr.f32.gmra.mrb[0].mxu0 %v205
    %v278 = vpop.f32.mrb[0].mxu0
    %v279 = vadd.f32 %v198, %v278
    %v280 = vpop.f32.mrb[0].mxu0
    %281 = vdwg.mxu0
    %282 = vst.msk [vmem:[#allocation11] sm:$0xff] %vm96, %v274
    %283 = vst.msk [vmem:[#allocation11 + $0x8] sm:$0xff] %vm96, %v279
    // Predicated region
    $region42: #{tpu_custom_call.1} parent=1 // pred_check
      _
    $region43: #{tpu_custom_call.1} parent=1 // pred_check_branch
      %285 = sbr.rel (0) target = $region45
    $region44: #{tpu_custom_call.1} parent=1 // pred_region
      %s287 = ssub.s32 256, 256
      %288 = vsyncadd [#allocation4], %s287
      %s289 = sshll.u32 [#allocation11], 4
      %s290 = int_to_ptr.vmem [resolvable:$true] %s289
      %295 = dma.vmem_to_hbm [thread:$0]  %s290, 256, %s5, [#allocation4], 128, 128, 8
    $region45: #{tpu_custom_call.1} parent=1 // pred_fallthru
      _
    // Predicated region
    $region46: #{tpu_custom_call.1} parent=1 // pred_check
      _
    $region47: #{tpu_custom_call.1} parent=1 // pred_check_branch
      %297 = sbr.rel (0) target = $region49
    $region48: #{tpu_custom_call.1} parent=1 // pred_region
      %298 = dma.done [#allocation4], 256
    $region49: #{tpu_custom_call.1} parent=1 // pred_fallthru
      _
    %299 = vsyncpa [#allocation3], 1
    %300 = vsyncpa [#allocation6], 1
    %301 = vsyncpa [#allocation9], 1
    %302 = vsyncpa [#allocation4], 1

</llo_original>
